<compile_context>
chip_gen: v7x
topology: tpu7x:2x2x1
jax: 0.10.0
libtpu: 0.0.40
codegen_flags: <defaults>
</compile_context>

<pallas_src>
import functools

import jax
import jax.numpy as jnp
from jax import lax
from jax.experimental import pallas as pl
from jax.experimental.pallas import tpu as pltpu


def _quantize_kernel(x_ref, embed_ref, e2h_ref, q_ref, stats_ref, *,
                     n_embed, use_bf16_matmul):
    # x_ref block:   (1, dim, T)        channel-major input tile
    # embed_ref:     (dim, n_embed)     resident codebook (f32)
    # e2h_ref:       (1, n_embed)       0.5 * ||e_c||^2 (hoisted)
    # q_ref block:   (1, dim, T)        quantized output (lane-dense in T)
    # stats_ref:     (1, 1, 2, n_embed) row 0: code-usage counts
    #                                   row 1: sum((q - x)^2) (broadcast on lanes)
    x_t = x_ref[0]             # (dim, T) f32
    e = embed_ref[...]         # (dim, n_embed) f32
    e2h = e2h_ref[...]         # (1, n_embed) f32

    # xe[r, c] = <x_r, e_c>  (trans-A MXU matmul; rows live on the lanes of x_t)
    if use_bf16_matmul:
        # bf16 operands, f32 accumulation: full MXU rate on v6e/v7x.  Near-ties
        # in the argmin can resolve differently than the f32 reference.
        xe = lax.dot_general(x_t.astype(jnp.bfloat16), e.astype(jnp.bfloat16),
                             dimension_numbers=(((0,), (0,)), ((), ())),
                             preferred_element_type=jnp.float32)
    else:
        xe = lax.dot_general(x_t, e,
                             dimension_numbers=(((0,), (0,)), ((), ())),
                             preferred_element_type=jnp.float32)   # (T, n_embed)

    # argmin over codes of 0.5*dist(r,c) - 0.5*||x_r||^2 = 0.5||e_c||^2 - <x_r,e_c>
    # (row constant dropped; scale by 0.5 folded into the hoisted bias).
    proxy = e2h - xe                                               # (T, n_embed)
    min_val = jnp.min(proxy, axis=1, keepdims=True)                # (T, 1)
    # First-index tie-break (matches torch.max(-dist, 1)).
    # TODO(synk): switch to jnp.argmin once its Mosaic lowering is relied upon;
    # the iota trick below is known-good and preserves the tie-break.
    iota = lax.broadcasted_iota(jnp.int32, proxy.shape, 1)
    ind = jnp.min(jnp.where(proxy == min_val, iota, n_embed),
                  axis=1, keepdims=True)                           # (T, 1)
    onehot = (iota == ind).astype(jnp.float32)                     # (T, n_embed)

    # quantize in transposed (dim, T) layout:  q_t = embed @ onehot^T
    # (kept f32 so quantized values are bit-exact codebook columns).
    q_t = lax.dot_general(e, onehot,
                          dimension_numbers=(((1,), (1,)), ((), ())),
                          preferred_element_type=jnp.float32)      # (dim, T)
    q_ref[0] = q_t.astype(q_ref.dtype)

    # code-usage counts for this tile (reduced across tiles in the wrapper)
    counts = jnp.sum(onehot, axis=0, keepdims=True)                # (1, n_embed)

    # commitment-loss partial via the row-minimum identity:
    #   sum_r ||q_r - x_r||^2 = sum x^2 + 2 * sum_r min_val[r]
    sum_x2 = jnp.sum(jnp.sum(x_t * x_t, axis=0, keepdims=True),
                     axis=1, keepdims=True)                        # (1, 1)
    sum_min = jnp.sum(min_val, axis=0, keepdims=True)              # (1, 1)
    se = sum_x2 + 2.0 * sum_min                                    # (1, 1)

    # Pack [counts ; se] into a single lane-dense stats block (removes the
    # former (1,1,1,1) masked-store output stream).
    row = lax.broadcasted_iota(jnp.int32, (2, n_embed), 0)
    stats = jnp.where(row == 0, counts, se)                        # (2, n_embed)
    stats_ref[...] = stats.reshape(1, 1, 2, n_embed)


def _vmem_limit_bytes():
    """Generation-aware scoped-VMEM limit (leaves ~25% headroom)."""
    cap = None
    try:
        cap = getattr(pltpu.get_tpu_info(), "vmem_capacity_bytes", None)
    except Exception:
        cap = None
    if not cap:
        cap = 64 << 20            # conservative default: v7x per-TensorCore VMEM
    return min(int(cap) * 3 // 4, 112 << 20)


def _pick_tile(hw, dim, n_embed, vmem_budget, max_rows):
    """Largest lane-dense tile (multiple of 128) dividing H*W that fits the
    VMEM budget: (T, n_embed) distance/one-hot temporaries + double-buffered
    x/q tiles + the resident codebook."""
    for t in (2048, 1024, 512, 256, 128):
        if t > max_rows or hw % t:
            continue
        temps = 5 * t * n_embed * 4              # xe / proxy / iota / onehot / mask
        io = 2 * 2 * dim * t * 4                 # double-buffered x and q tiles
        resident = 2 * (dim + 1) * n_embed * 4   # codebook + e2 (double-buffered)
        if temps + io + resident <= vmem_budget:
            return t
    # Full extent is always a legal block (may be small / unaligned).
    return hw


def quantize_forward(x_nchw, embed, *, commitment=1.0, max_rows_per_tile=1024,
                     use_bf16_distance=False):
    """Forward pass of Quantize.  x_nchw: (B, C, H, W), embed: (dim, n_embed).

    Returns (quantize_nchw, diff, perplexity).  The straight-through estimator
    `x + (quantize - x).detach()` has forward value == quantize, so no extra
    op is needed.
    """
    B, C, H, W = x_nchw.shape
    dim, n_embed = embed.shape
    assert C == dim
    HW = H * W

    vmem_limit = _vmem_limit_bytes()
    T = _pick_tile(HW, dim, n_embed, vmem_limit // 2, max_rows_per_tile)
    n_tiles = HW // T

    # Channel-major flatten: (B, C, H, W) -> (B, dim, H*W) is a free reshape.
    x_flat = x_nchw.reshape(B, dim, HW)
    embed_f32 = embed.astype(jnp.float32)
    e2_half = 0.5 * jnp.sum(embed_f32 * embed_f32, axis=0, keepdims=True)  # (1, n_embed)

    kernel = functools.partial(_quantize_kernel, n_embed=n_embed,
                               use_bf16_matmul=use_bf16_distance)

    out_shapes = (
        jax.ShapeDtypeStruct((B, dim, HW), x_flat.dtype),             # quantize
        jax.ShapeDtypeStruct((B, n_tiles, 2, n_embed), jnp.float32),  # counts/SSE
    )

    grid_spec = pltpu.PrefetchScalarGridSpec(
        num_scalar_prefetch=0,
        grid=(B, n_tiles),
        in_specs=[
            pl.BlockSpec((1, dim, T), lambda b, t: (b, 0, t)),
            # TODO(synk): pipeline_mode=pl.Buffered(1) would single-buffer these
            # grid-invariant operands and save dim*n_embed*4 B of resident VMEM.
            pl.BlockSpec((dim, n_embed), lambda b, t: (0, 0)),
            pl.BlockSpec((1, n_embed), lambda b, t: (0, 0)),
        ],
        out_specs=[
            pl.BlockSpec((1, dim, T), lambda b, t: (b, 0, t)),
            pl.BlockSpec((1, 1, 2, n_embed), lambda b, t: (b, t, 0, 0)),
        ],
    )

    q_flat, stats_p = pl.pallas_call(
        kernel,
        out_shape=out_shapes,
        grid_spec=grid_spec,
        compiler_params=pltpu.CompilerParams(
            dimension_semantics=("parallel", "parallel"),
            vmem_limit_bytes=vmem_limit),
    )(x_flat, embed_f32, e2_half)

    # Free reshape back to NCHW (no transpose needed).
    quantize_nchw = q_flat.reshape(B, dim, H, W)

    # Tiny final reductions in the wrapper (keeps the grid fully parallel).
    counts = jnp.sum(stats_p[:, :, 0, :], axis=(0, 1))                # (n_embed,)
    avg = counts / float(B * HW)
    perplexity = jnp.exp(-jnp.sum(avg * jnp.log(avg + 1e-10)))

    se_b = jnp.sum(stats_p[:, :, 1, 0], axis=1)                       # (B,)
    diff = (float(commitment) * se_b / float(HW * dim))[:, None]      # (B, 1)

    return quantize_nchw, diff, perplexity


def _reference(x_nchw, embed, commitment=1.0):
    """Pure-JAX reference mirroring the PyTorch forward (eval mode)."""
    B, C, H, W = x_nchw.shape
    dim, n_embed = embed.shape
    x = jnp.transpose(x_nchw, (0, 2, 3, 1))
    flatten = x.reshape(-1, dim)
    dist = (jnp.sum(flatten ** 2, axis=1, keepdims=True)
            - 2.0 * flatten @ embed
            + jnp.sum(embed ** 2, axis=0, keepdims=True))
    ind = jnp.argmax(-dist, axis=1)
    onehot = jax.nn.one_hot(ind, n_embed, dtype=flatten.dtype)
    quantize = embed.T[ind].reshape(x.shape)
    diff = commitment * jnp.mean(
        jnp.mean((quantize - x) ** 2, axis=(1, 2)), axis=1, keepdims=True)
    avg = jnp.mean(onehot, axis=0)
    perp = jnp.exp(-jnp.sum(avg * jnp.log(avg + 1e-10)))
    return jnp.transpose(quantize, (0, 3, 1, 2)), diff, perp


if __name__ == "__main__":
    B, dim, H, W = 2, 4, 16, 16
    n_embed = 32

    key = jax.random.PRNGKey(0)
    kx, ke = jax.random.split(key)
    x = jax.random.normal(kx, (B, dim, H, W), dtype=jnp.float32)
    embed = jax.random.normal(ke, (dim, n_embed), dtype=jnp.float32)

    # max_rows_per_tile=128 forces 2 HW-tiles at this small shape so the
    # multi-tile partial-reduction path is exercised.
    q, diff, perp = quantize_forward(x, embed, commitment=1.0,
                                     max_rows_per_tile=128)
    jax.block_until_ready((q, diff, perp))

    q_ref, diff_ref, perp_ref = _reference(x, embed, commitment=1.0)
    assert q.shape == (B, dim, H, W) and diff.shape == (B, 1)
    assert jnp.allclose(q, q_ref, atol=1e-5, rtol=1e-5)
    assert jnp.allclose(diff, diff_ref, atol=1e-5, rtol=1e-4)
    assert jnp.allclose(perp, perp_ref, atol=1e-5, rtol=1e-5)

    # Exercise the bf16 MXU distance path (v6e/v7x fast path).  Near-ties may
    # resolve to a different code than the f32 reference, so only sanity-check.
    q_b, diff_b, perp_b = quantize_forward(x, embed, commitment=1.0,
                                           max_rows_per_tile=128,
                                           use_bf16_distance=True)
    jax.block_until_ready((q_b, diff_b, perp_b))
    assert q_b.shape == (B, dim, H, W) and diff_b.shape == (B, 1)
    assert bool(jnp.all(jnp.isfinite(q_b))) and bool(jnp.all(jnp.isfinite(diff_b)))

    print("KERNEL_OK")
</pallas_src>

<mosaic_0001>
module attributes {stable_mosaic.version = 11 : i64} {
  func.func @_quantize_kernel(%arg0: i32, %arg1: i32, %arg2: memref<1x4x128xf32, #tpu.memory_space<vmem>>, %arg3: memref<4x32xf32, #tpu.memory_space<vmem>>, %arg4: memref<1x32xf32, #tpu.memory_space<vmem>>, %arg5: memref<1x4x128xf32, #tpu.memory_space<vmem>>, %arg6: memref<1x1x2x32xf32, #tpu.memory_space<vmem>>) attributes {dimension_semantics = [#tpu.dimension_semantics<parallel>, #tpu.dimension_semantics<parallel>], iteration_bounds = array<i64: 2, 2>, scalar_prefetch = 0 : i64, scratch_operands = 0 : i64, tpu.core_type = #tpu.core_type<tc>, window_params = [{transform_indices = @transform_0, window_bounds = array<i64: 1, 4, 128>}, {pipeline_mode = #tpu.pipeline_mode<synchronous>, transform_indices = @transform_1, window_bounds = array<i64: 4, 32>}, {pipeline_mode = #tpu.pipeline_mode<synchronous>, transform_indices = @transform_2, window_bounds = array<i64: 1, 32>}, {transform_indices = @transform_3, window_bounds = array<i64: 1, 4, 128>}, {transform_indices = @transform_4, window_bounds = array<i64: 1, 1, 2, 32>}]} {
    %c0 = arith.constant 0 : index
    %c0_0 = arith.constant 0 : index
    %c0_1 = arith.constant 0 : index
    %0 = vector.load %arg2[%c0, %c0_0, %c0_1] : memref<1x4x128xf32, #tpu.memory_space<vmem>>, vector<1x4x128xf32>
    %1 = vector.shape_cast %0 : vector<1x4x128xf32> to vector<4x128xf32>
    %c0_2 = arith.constant 0 : index
    %c0_3 = arith.constant 0 : index
    %2 = vector.load %arg3[%c0_2, %c0_3] : memref<4x32xf32, #tpu.memory_space<vmem>>, vector<4x32xf32>
    %c0_4 = arith.constant 0 : index
    %c0_5 = arith.constant 0 : index
    %3 = vector.load %arg4[%c0_4, %c0_5] : memref<1x32xf32, #tpu.memory_space<vmem>>, vector<1x32xf32>
    %cst = arith.constant dense<0.000000e+00> : vector<128x32xf32>
    %4 = tpu.matmul %1, %2, %cst {dimension_numbers = #tpu.dot_dimension_numbers<[0], [0], [1], [1], [0, 1, 1, 1], [], []>} : vector<4x128xf32>, vector<4x32xf32>, vector<128x32xf32> -> vector<128x32xf32>
    %5 = vector.broadcast %3 : vector<1x32xf32> to vector<128x32xf32>
    %6 = arith.subf %5, %4 : vector<128x32xf32>
    %cst_6 = arith.constant dense<0x7F800000> : vector<128xf32>
    %7 = vector.multi_reduction <minimumf>, %6, %cst_6 [1] : vector<128x32xf32> to vector<128xf32>
    %8 = vector.shape_cast %7 : vector<128xf32> to vector<128x1xf32>
    %9 = tpu.iota {dimensions = array<i32: 1>} : vector<128x32xi32>
    %10 = vector.broadcast %8 : vector<128x1xf32> to vector<128x32xf32>
    %11 = arith.cmpf oeq, %6, %10 : vector<128x32xf32>
    %c32_i32 = arith.constant 32 : i32
    %12 = vector.broadcast %c32_i32 : i32 to vector<128x32xi32>
    %13 = arith.select %11, %9, %12 : vector<128x32xi1>, vector<128x32xi32>
    %cst_7 = arith.constant dense<2147483647> : vector<128xi32>
    %14 = vector.multi_reduction <minsi>, %13, %cst_7 [1] : vector<128x32xi32> to vector<128xi32>
    %15 = vector.shape_cast %14 : vector<128xi32> to vector<128x1xi32>
    %16 = vector.broadcast %15 : vector<128x1xi32> to vector<128x32xi32>
    %17 = arith.cmpi eq, %9, %16 : vector<128x32xi32>
    %18 = arith.extui %17 : vector<128x32xi1> to vector<128x32xi32>
    %19 = arith.sitofp %18 : vector<128x32xi32> to vector<128x32xf32>
    %cst_8 = arith.constant dense<0.000000e+00> : vector<4x128xf32>
    %20 = tpu.matmul %2, %19, %cst_8 {dimension_numbers = #tpu.dot_dimension_numbers<[1], [1], [0], [0], [0, 0, 1, 0], [], []>} : vector<4x32xf32>, vector<128x32xf32>, vector<4x128xf32> -> vector<4x128xf32>
    %c0_9 = arith.constant 0 : index
    %c0_10 = arith.constant 0 : index
    %c0_11 = arith.constant 0 : index
    %21 = vector.load %arg5[%c0_9, %c0_10, %c0_11] : memref<1x4x128xf32, #tpu.memory_space<vmem>>, vector<1x4x128xf32>
    %22 = vector.shape_cast %21 : vector<1x4x128xf32> to vector<4x128xf32>
    %23 = vector.shape_cast %20 : vector<4x128xf32> to vector<1x4x128xf32>
    tpu.vector_store %arg5[%c0_9, %c0_10, %c0_11], %23 {strides = array<i32>} : memref<1x4x128xf32, #tpu.memory_space<vmem>>, vector<1x4x128xf32>,
    %cst_12 = arith.constant dense<0.000000e+00> : vector<32xf32>
    %24 = vector.multi_reduction <add>, %19, %cst_12 [0] : vector<128x32xf32> to vector<32xf32>
    %25 = vector.shape_cast %24 : vector<32xf32> to vector<1x32xf32>
    %26 = arith.mulf %1, %1 : vector<4x128xf32>
    %cst_13 = arith.constant dense<0.000000e+00> : vector<128xf32>
    %27 = vector.multi_reduction <add>, %26, %cst_13 [0] : vector<4x128xf32> to vector<128xf32>
    %28 = vector.shape_cast %27 : vector<128xf32> to vector<1x128xf32>
    %cst_14 = arith.constant dense<0.000000e+00> : vector<1xf32>
    %29 = vector.multi_reduction <add>, %28, %cst_14 [1] : vector<1x128xf32> to vector<1xf32>
    %30 = vector.shape_cast %29 : vector<1xf32> to vector<1x1xf32>
    %cst_15 = arith.constant dense<0.000000e+00> : vector<1xf32>
    %31 = vector.multi_reduction <add>, %8, %cst_15 [0] : vector<128x1xf32> to vector<1xf32>
    %32 = vector.shape_cast %31 : vector<1xf32> to vector<1x1xf32>
    %cst_16 = arith.constant 2.000000e+00 : f32
    %33 = vector.broadcast %cst_16 : f32 to vector<1x1xf32>
    %34 = arith.mulf %33, %32 : vector<1x1xf32>
    %35 = arith.addf %30, %34 : vector<1x1xf32>
    %36 = tpu.iota {dimensions = array<i32: 0>} : vector<2x32xi32>
    %c0_i32 = arith.constant 0 : i32
    %37 = vector.broadcast %c0_i32 : i32 to vector<2x32xi32>
    %38 = arith.cmpi eq, %36, %37 : vector<2x32xi32>
    %39 = vector.shape_cast %25 : vector<1x32xf32> to vector<1x32xf32>
    %40 = vector.broadcast %39 : vector<1x32xf32> to vector<2x32xf32>
    %41 = vector.shape_cast %35 : vector<1x1xf32> to vector<1x1xf32>
    %42 = vector.broadcast %41 : vector<1x1xf32> to vector<2x32xf32>
    %43 = arith.select %38, %40, %42 : vector<2x32xi1>, vector<2x32xf32>
    %44 = vector.shape_cast %43 : vector<2x32xf32> to vector<1x1x2x32xf32>
    %c0_17 = arith.constant 0 : index
    %c0_18 = arith.constant 0 : index
    %c0_19 = arith.constant 0 : index
    %c0_20 = arith.constant 0 : index
    %45 = vector.load %arg6[%c0_17, %c0_18, %c0_19, %c0_20] : memref<1x1x2x32xf32, #tpu.memory_space<vmem>>, vector<1x1x2x32xf32>
    tpu.vector_store %arg6[%c0_17, %c0_18, %c0_19, %c0_20], %44 {strides = array<i32>} : memref<1x1x2x32xf32, #tpu.memory_space<vmem>>, vector<1x1x2x32xf32>,
    return
  }
  func.func @transform_0(%arg0: i32, %arg1: i32) -> (i32, i32, i32) {
    %c0_i32 = arith.constant 0 : i32
    %c0_i32_0 = arith.constant 0 : i32
    return %arg0, %c0_i32, %arg1 : i32, i32, i32
  }
  func.func @transform_1(%arg0: i32, %arg1: i32) -> (i32, i32) {
    %c0_i32 = arith.constant 0 : i32
    %c0_i32_0 = arith.constant 0 : i32
    %c0_i32_1 = arith.constant 0 : i32
    return %c0_i32, %c0_i32_0 : i32, i32
  }
  func.func @transform_2(%arg0: i32, %arg1: i32) -> (i32, i32) {
    %c0_i32 = arith.constant 0 : i32
    %c0_i32_0 = arith.constant 0 : i32
    %c0_i32_1 = arith.constant 0 : i32
    return %c0_i32, %c0_i32_0 : i32, i32
  }
  func.func @transform_3(%arg0: i32, %arg1: i32) -> (i32, i32, i32) {
    %c0_i32 = arith.constant 0 : i32
    %c0_i32_0 = arith.constant 0 : i32
    return %arg0, %c0_i32, %arg1 : i32, i32, i32
  }
  func.func @transform_4(%arg0: i32, %arg1: i32) -> (i32, i32, i32, i32) {
    %c0_i32 = arith.constant 0 : i32
    %c0_i32_0 = arith.constant 0 : i32
    %c0_i32_1 = arith.constant 0 : i32
    return %arg0, %arg1, %c0_i32, %c0_i32_0 : i32, i32, i32, i32
  }
}

</mosaic_0001>

<llo_original>
// kernel: tpu_custom_call.1
$region0: #{tpu_custom_call.1}
  #allocation0 [shape = 'u32[]', space=smem, size = 0x4, offset = 0x4, fixed_abs, tag = 'smem constant byte address 0x4 - core index']
  #allocation1 [shape = 'u32[144,128]{1,0:T(1,128)}', space=vmem, size = 0x12000, scoped, tag = 'internal scratch']
  %s0 = inlined_call_operand.hbm [shape: f32[2,4,256], index: 0, kind: input, shape index: {}]
  %s1 = inlined_call_operand.hbm [shape: f32[4,32], index: 1, kind: input, shape index: {}]
  %s2 = inlined_call_operand.vmem [shape: f32[1,32], index: 2, kind: input, shape index: {}]
  %s3 = inlined_call_operand.hbm [shape: f32[2,4,256], index: 3, kind: output, shape index: {0}]
  %s4 = inlined_call_operand.hbm [shape: f32[2,2,2,32], index: 4, kind: output, shape index: {1}]
  %5 = xla_tuple %s3, %s4
  %s6 = sld [smem:[#allocation0]]
  $region61: #{tpu_custom_call.1} parent=0
    _
  %s8 = ssub.s32 1, %s6
  %s9 = scalar_select 0, %s8, %s6
  $region1: #{tpu_custom_call.1} parent=0
    #allocation2 [shape = 'u8[4096]{0}', space=vmem, size = 0x1000, scoped, tag = 'input window, operand 0']
    #allocation3 [shape = 's32[2]{0}', space=sflag, size = 0x8, scoped, tag = 'scoped memory for tpu_custom_call.1']
    #allocation4 [shape = 's32[2]{0}', space=sflag, size = 0x8, scoped, tag = 'scoped memory for tpu_custom_call.1']
    #allocation5 [shape = 'u8[2048]{0}', space=vmem, size = 0x800, scoped, tag = 'input window, operand 1, single buffered']
    #allocation6 [shape = 's32[1]{0}', space=sflag, size = 0x4, scoped, tag = 'scoped memory for tpu_custom_call.1']
    #allocation7 [shape = 'u8[4096]{0}', space=vmem, size = 0x1000, scoped, tag = 'output window, operand 0']
    #allocation8 [shape = 'u8[2048]{0}', space=vmem, size = 0x800, scoped, tag = 'output window, operand 1']
    #allocation9 [shape = 's32[2]{0}', space=sflag, size = 0x8, scoped, tag = 'scoped memory for tpu_custom_call.1']
    %10 = vsyncpa [#allocation3], 0
    %s11 = scalar_lea.sflag [#allocation3], 1
    %12 = vsyncpa %s11, 0
    %13 = vsyncpa [#allocation6], 0
    %14 = vsyncpa [#allocation4], 0
    %s15 = scalar_lea.sflag [#allocation4], 1
    %16 = vsyncpa %s15, 0
    %17 = vsyncpa [#allocation9], 0
    %s18 = scalar_lea.sflag [#allocation9], 1
    %19 = vsyncpa %s18, 0
    loop: start=0, step=1, limit=6
    $region2: #{tpu_custom_call.1} parent=1 // loop_pre_header
      _
    $region3: #{tpu_custom_call.1} parent=1 // loop_header
      %s21 = sphi 0, %s25
      %p22 = scmp.ge.s32.totalorder %s21, 6
      %s28 = sphi 0, %s40
      %s29 = sphi 0, %s36
      %s30 = sphi 0, %s28
      %s31 = sphi 0, %s29
      %s32 = sphi 0, %s30
      %s33 = sphi 0, %s31
      %s45 = sphi 0, %s47
      %s48 = sphi 0, %s45
      %s49 = sphi 0, %s48
      %s65 = sphi 0, %s49
      %s69 = sphi 0, %s69
      %s71 = sphi 0, %s69
      %s72 = sphi 0, %s71
      %s86 = sphi 0, %s72
      %s90 = sphi 0, %s90
      %s92 = sphi 0, %s90
      %s93 = sphi 0, %s92
      %s107 = sphi 0, %s93
      %s115 = sphi 0, %s117
      %s118 = sphi 0, %s115
      %s119 = sphi 0, %s118
      %s135 = sphi 0, %s119
      %s143 = sphi 0, %s145
      %s146 = sphi 0, %s143
      %s147 = sphi 0, %s146
      %s163 = sphi 0, %s147
    $region4: #{tpu_custom_call.1} parent=1 // loop_header_branch
      %24 = sbr.rel (%p22) target = $region8
    $region5: #{tpu_custom_call.1} parent=1 // loop_body
      %s26 = ssub.s32 %s21, 1
      %s27 = ssub.s32 %s21, 2
      %s34 = sadd.s32 1, %s29
      %p35 = scmp.ge.s32.totalorder %s34, 2
      %s36 = scalar_select %p35, 0, %s34
      %s37 = sadd.s32 1, %s28
      %s38 = scalar_select %p35, %s37, %s28
      %p39 = scmp.ge.s32.totalorder %s38, 2
      %s40 = scalar_select %p39, 0, %s38
      %s41 = ssub.s32 %s28, %s40
      %s42 = ssub.s32 %s29, %s36
      %s43 = sor.u32 %s41, %s42
      %p44 = scmp.eq.s32.totalorder %s43, 0
      %s46 = sadd.s32 %s45, 1
      %s47 = scalar_select %p44, %s45, %s46
      %p50 = pneg %p44
      %p51 = scmp.eq.s32.totalorder %s21, 3
      %p52 = por %p50, %p51
      %p53 = scmp.ne.s32.totalorder %s45, %s48
      %p54 = scmp.eq.s32.totalorder %s21, 0
      %p55 = por %p53, %p54
      %p56 = scmp.ne.s32.totalorder %s45, %s48
      %p57 = scmp.eq.s32.totalorder %s26, 3
      %p58 = por %p56, %p57
      %p59 = scmp.ne.s32.totalorder %s48, %s49
      %p60 = scmp.eq.s32.totalorder %s26, 0
      %p61 = por %p59, %p60
      %p62 = scmp.ne.s32.totalorder %s48, %s49
      %p63 = scmp.eq.s32.totalorder %s27, 3
      %p64 = por %p62, %p63
      %p66 = scmp.ne.s32.totalorder %s49, %s65
      %p67 = scmp.eq.s32.totalorder %s27, 0
      %p68 = por %p66, %p67
      %s70 = sadd.s32 %s69, 1
      %p73 = scmp.eq.s32.totalorder %s21, 3
      %p74 = scmp.ne.s32.totalorder %s69, %s71
      %p75 = scmp.eq.s32.totalorder %s21, 0
      %p76 = por %p74, %p75
      %p77 = scmp.ne.s32.totalorder %s69, %s71
      %p78 = scmp.eq.s32.totalorder %s26, 3
      %p79 = por %p77, %p78
      %p80 = scmp.ne.s32.totalorder %s71, %s72
      %p81 = scmp.eq.s32.totalorder %s26, 0
      %p82 = por %p80, %p81
      %p83 = scmp.ne.s32.totalorder %s71, %s72
      %p84 = scmp.eq.s32.totalorder %s27, 3
      %p85 = por %p83, %p84
      %p87 = scmp.ne.s32.totalorder %s72, %s86
      %p88 = scmp.eq.s32.totalorder %s27, 0
      %p89 = por %p87, %p88
      %s91 = sadd.s32 %s90, 1
      %p94 = scmp.eq.s32.totalorder %s21, 3
      %p95 = scmp.ne.s32.totalorder %s90, %s92
      %p96 = scmp.eq.s32.totalorder %s21, 0
      %p97 = por %p95, %p96
      %p98 = scmp.ne.s32.totalorder %s90, %s92
      %p99 = scmp.eq.s32.totalorder %s26, 3
      %p100 = por %p98, %p99
      %p101 = scmp.ne.s32.totalorder %s92, %s93
      %p102 = scmp.eq.s32.totalorder %s26, 0
      %p103 = por %p101, %p102
      %p104 = scmp.ne.s32.totalorder %s92, %s93
      %p105 = scmp.eq.s32.totalorder %s27, 3
      %p106 = por %p104, %p105
      %p108 = scmp.ne.s32.totalorder %s93, %s107
      %p109 = scmp.eq.s32.totalorder %s27, 0
      %p110 = por %p108, %p109
      %s111 = ssub.s32 %s28, %s40
      %s112 = ssub.s32 %s29, %s36
      %s113 = sor.u32 %s111, %s112
      %p114 = scmp.eq.s32.totalorder %s113, 0
      %s116 = sadd.s32 %s115, 1
      %s117 = scalar_select %p114, %s115, %s116
      %p120 = pneg %p114
      %p121 = scmp.eq.s32.totalorder %s21, 3
      %p122 = por %p120, %p121
      %p123 = scmp.ne.s32.totalorder %s115, %s118
      %p124 = scmp.eq.s32.totalorder %s21, 0
      %p125 = por %p123, %p124
      %p126 = scmp.ne.s32.totalorder %s115, %s118
      %p127 = scmp.eq.s32.totalorder %s26, 3
      %p128 = por %p126, %p127
      %p129 = scmp.ne.s32.totalorder %s118, %s119
      %p130 = scmp.eq.s32.totalorder %s26, 0
      %p131 = por %p129, %p130
      %p132 = scmp.ne.s32.totalorder %s118, %s119
      %p133 = scmp.eq.s32.totalorder %s27, 3
      %p134 = por %p132, %p133
      %p136 = scmp.ne.s32.totalorder %s119, %s135
      %p137 = scmp.eq.s32.totalorder %s27, 0
      %p138 = por %p136, %p137
      %s139 = ssub.s32 %s28, %s40
      %s140 = ssub.s32 %s29, %s36
      %s141 = sor.u32 %s139, %s140
      %p142 = scmp.eq.s32.totalorder %s141, 0
      %s144 = sadd.s32 %s143, 1
      %s145 = scalar_select %p142, %s143, %s144
      %p148 = pneg %p142
      %p149 = scmp.eq.s32.totalorder %s21, 3
      %p150 = por %p148, %p149
      %p151 = scmp.ne.s32.totalorder %s143, %s146
      %p152 = scmp.eq.s32.totalorder %s21, 0
      %p153 = por %p151, %p152
      %p154 = scmp.ne.s32.totalorder %s143, %s146
      %p155 = scmp.eq.s32.totalorder %s26, 3
      %p156 = por %p154, %p155
      %p157 = scmp.ne.s32.totalorder %s146, %s147
      %p158 = scmp.eq.s32.totalorder %s26, 0
      %p159 = por %p157, %p158
      %p160 = scmp.ne.s32.totalorder %s146, %s147
      %p161 = scmp.eq.s32.totalorder %s27, 3
      %p162 = por %p160, %p161
      %p164 = scmp.ne.s32.totalorder %s147, %s163
      %p165 = scmp.eq.s32.totalorder %s27, 0
      %p166 = por %p164, %p165
      %p167 = scmp.le.s32.totalorder 1, %s21
      %p168 = scmp.lt.s32.totalorder %s21, 5
      %p169 = pnand %p167, %p168
      %p170 = pneg %p169
      // Predicated region
      $region9: #{tpu_custom_call.1} parent=5 // pred_check
        _
      $region10: #{tpu_custom_call.1} parent=5 // pred_check_branch
        %172 = sbr.rel (%p169) target = $region12
      $region11: #{tpu_custom_call.1} parent=5 // pred_region
        %s173 = ssub.s32 %s21, 1
        // Predicated region
        $region13: #{tpu_custom_call.1} parent=11 // pred_check
          %p174 = pneg %p82
        $region14: #{tpu_custom_call.1} parent=11 // pred_check_branch
          %176 = sbr.rel (%p174) target = $region16
        $region15: #{tpu_custom_call.1} parent=11 // pred_region
          %s178 = ssub.s32 64, 64
          %179 = vsyncadd [#allocation6], %s178
          %s181 = sshll.u32 [#allocation5], 4
          %s182 = int_to_ptr.vmem [resolvable:$true] %s181
          %184 = dma.hbm_to_vmem [thread:$0]  %s1, 64, %s182, [#allocation6]
        $region16: #{tpu_custom_call.1} parent=11 // pred_fallthru
          _
        // Predicated region
        $region17: #{tpu_custom_call.1} parent=11 // pred_check
          %p185 = pneg %p103
        $region18: #{tpu_custom_call.1} parent=11 // pred_check_branch
          %187 = sbr.rel (%p185) target = $region20
        $region19: #{tpu_custom_call.1} parent=11 // pred_region
          _
        $region20: #{tpu_custom_call.1} parent=11 // pred_fallthru
          _
      $region12: #{tpu_custom_call.1} parent=5 // pred_fallthru
        _
      %p188 = scmp.lt.s32.totalorder %s21, 4
      // Predicated region
      $region21: #{tpu_custom_call.1} parent=5 // pred_check
        %p189 = pneg %p188
      $region22: #{tpu_custom_call.1} parent=5 // pred_check_branch
        %191 = sbr.rel (%p189) target = $region24
      $region23: #{tpu_custom_call.1} parent=5 // pred_region
        // Predicated region
        $region25: #{tpu_custom_call.1} parent=23 // pred_check
          %p192 = pneg %p55
        $region26: #{tpu_custom_call.1} parent=23 // pred_check_branch
          %194 = sbr.rel (%p192) target = $region28
        $region27: #{tpu_custom_call.1} parent=23 // pred_region
          %s195 = sand.u32 %s45, 1
          %s196 = scalar_lea.sflag [#allocation3], %s195
          %s197 = sand.u32 %s45, 1
          %s198 = smul.addr %s197, 4
          %s199 = scalar_lea.vmem [#allocation2], %s198
          %s201 = ssub.s32 64, 64
          %202 = vsyncadd %s196, %s201
          %s203 = smul.addr %s28, 2
          %s204 = sadd.s32 %s29, %s203
          %s205 = smul.addr %s204, 64
          %s206 = scalar_lea.hbm %s0, %s205
          %s208 = sshll.u32 %s199, 4
          %s209 = int_to_ptr.vmem [resolvable:$true] %s208
          %211 = dma.hbm_to_vmem [thread:$0]  %s206, 64, %s209, %s196
        $region28: #{tpu_custom_call.1} parent=23 // pred_fallthru
          _
      $region24: #{tpu_custom_call.1} parent=5 // pred_fallthru
        _
      %p212 = scmp.le.s32.totalorder 1, %s21
      %p213 = scmp.lt.s32.totalorder %s21, 5
      %p214 = pnand %p212, %p213
      %p215 = pneg %p214
      // Predicated region
      $region29: #{tpu_custom_call.1} parent=5 // pred_check
        _
      $region30: #{tpu_custom_call.1} parent=5 // pred_check_branch
        %217 = sbr.rel (%p214) target = $region32
      $region31: #{tpu_custom_call.1} parent=5 // pred_region
        %s218 = ssub.s32 %s21, 1
        %s219 = sand.u32 %s48, 1
        %s220 = scalar_lea.sflag [#allocation3], %s219
        %s221 = sand.u32 %s48, 1
        %s222 = smul.addr %s221, 4
        %s223 = scalar_lea.vmem [#allocation2], %s222
        // Predicated region
        $region33: #{tpu_custom_call.1} parent=31 // pred_check
          %p224 = pneg %p61
        $region34: #{tpu_custom_call.1} parent=31 // pred_check_branch
          %226 = sbr.rel (%p224) target = $region36
        $region35: #{tpu_custom_call.1} parent=31 // pred_region
          %227 = dma.done %s220, 64
        $region36: #{tpu_custom_call.1} parent=31 // pred_fallthru
          _
        // Predicated region
        $region37: #{tpu_custom_call.1} parent=31 // pred_check
          %p228 = pneg %p82
        $region38: #{tpu_custom_call.1} parent=31 // pred_check_branch
          %230 = sbr.rel (%p228) target = $region40
        $region39: #{tpu_custom_call.1} parent=31 // pred_region
          %231 = dma.done [#allocation6], 64
        $region40: #{tpu_custom_call.1} parent=31 // pred_fallthru
          _
        %s232 = sand.u32 %s48, 1
        %s233 = scalar_lea.sflag [#allocation3], %s232
        %s234 = sand.u32 %s48, 1
        %s235 = smul.addr %s234, 4
        %s236 = scalar_lea.vmem [#allocation2], %s235
        %p237 = pneg %p61
        %p238 = pneg %p58
        %p239 = pneg %p82
        %p240 = pneg %p79
        %p241 = pneg %p103
        %p242 = pneg %p100
        %p243 = pneg %p131
        %p244 = pneg %p128
        %s245 = sand.u32 %s118, 1
        %s246 = scalar_lea.sflag [#allocation4], %s245
        %s247 = sand.u32 %s118, 1
        %s248 = smul.addr %s247, 4
        %s249 = scalar_lea.vmem [#allocation7], %s248
        %p250 = pneg %p159
        %p251 = pneg %p156
        %s252 = sand.u32 %s146, 1
        %s253 = scalar_lea.sflag [#allocation9], %s252
        %s254 = sand.u32 %s146, 1
        %s255 = smul.addr %s254, 2
        %s256 = scalar_lea.vmem [#allocation8], %s255
        %v257 = vld [vmem:[%s223] sm:$0xf]
        %v258 = vld [vmem:[#allocation5] sm:$0xf]
        %v259 = vld [vmem:[%s2] sm:$0x1]
        %260 = vxpose.xlu0.b32.start [1/16] %v257, 128
        %261 = vxpose.xlu0.b32.cont [2/16] 0.0, 128
        %262 = vxpose.xlu0.b32.cont [3/16] 0.0, 128
        %263 = vxpose.xlu0.b32.cont [4/16] 0.0, 128
        %264 = vxpose.xlu0.b32.cont [5/16] 0.0, 128
        %265 = vxpose.xlu0.b32.cont [6/16] 0.0, 128
        %266 = vxpose.xlu0.b32.cont [7/16] 0.0, 128
        %267 = vxpose.xlu0.b32.cont [8/16] 0.0, 128
        %268 = vxpose.xlu0.b32.cont [9/16] 0.0, 128
        %269 = vxpose.xlu0.b32.cont [10/16] 0.0, 128
        %270 = vxpose.xlu0.b32.cont [11/16] 0.0, 128
        %271 = vxpose.xlu0.b32.cont [12/16] 0.0, 128
        %272 = vxpose.xlu0.b32.cont [13/16] 0.0, 128
        %273 = vxpose.xlu0.b32.cont [14/16] 0.0, 128
        %274 = vxpose.xlu0.b32.cont [15/16] 0.0, 128
        %275 = vxpose.xlu0.b32.end [16/16] 0.0, 128
        %v276 = vpop.trf.xlu0
        %v277 = vpop.trf.xlu0
        %v278 = vpop.trf.xlu0
        %v279 = vpop.trf.xlu0
        %v280 = vpop.trf.xlu0
        %v281 = vpop.trf.xlu0
        %v282 = vpop.trf.xlu0
        %v283 = vpop.trf.xlu0
        %v284 = vpop.trf.xlu0
        %v285 = vpop.trf.xlu0
        %v286 = vpop.trf.xlu0
        %v287 = vpop.trf.xlu0
        %v288 = vpop.trf.xlu0
        %v289 = vpop.trf.xlu0
        %v290 = vpop.trf.xlu0
        %v291 = vpop.trf.xlu0
        %vm292 = vcmask 31744
        %v294 = vsel %vm292, %v276, 0
        %v297 = vsel %vm292, %v277, 0
        %v300 = vsel %vm292, %v278, 0
        %v303 = vsel %vm292, %v279, 0
        %v306 = vsel %vm292, %v280, 0
        %v309 = vsel %vm292, %v281, 0
        %v312 = vsel %vm292, %v282, 0
        %v315 = vsel %vm292, %v283, 0
        %v318 = vsel %vm292, %v284, 0
        %v321 = vsel %vm292, %v285, 0
        %v324 = vsel %vm292, %v286, 0
        %v327 = vsel %vm292, %v287, 0
        %v330 = vsel %vm292, %v288, 0
        %v333 = vsel %vm292, %v289, 0
        %v336 = vsel %vm292, %v290, 0
        %v339 = vsel %vm292, %v291, 0
        %vm341 = vcmask 1043456
        %v343 = vsel %vm341, %v258, 0
        %345 = vmatprep.subr.mxu0 0.0
        %346 = vmatpush1.msra.mxu0 %v343
        %347 = vmatprep.subr.mxu0 0.0
        %348 = vmatpush1.msra.mxu0 0.0
        %349 = vmatprep.subr.mxu0 0.0
        %350 = vmatpush1.msra.mxu0 0.0
        %351 = vmatprep.subr.mxu0 0.0
        %352 = vmatpush1.msra.mxu0 0.0
        %353 = vmatprep.subr.mxu0 0.0
        %354 = vmatpush1.msra.mxu0 0.0
        %355 = vmatprep.subr.mxu0 0.0
        %356 = vmatpush1.msra.mxu0 0.0
        %357 = vmatprep.subr.mxu0 0.0
        %358 = vmatpush1.msra.mxu0 0.0
        %359 = vmatprep.subr.mxu0 0.0
        %360 = vmatpush1.msra.mxu0 0.0
        %361 = vmatprep.subr.mxu0 0.0
        %362 = vmatpush1.msra.mxu0 0.0
        %363 = vmatprep.subr.mxu0 0.0
        %364 = vmatpush1.msra.mxu0 0.0
        %365 = vmatprep.subr.mxu0 0.0
        %366 = vmatpush1.msra.mxu0 0.0
        %367 = vmatprep.subr.mxu0 0.0
        %368 = vmatpush1.msra.mxu0 0.0
        %369 = vmatprep.subr.mxu0 0.0
        %370 = vmatpush1.msra.mxu0 0.0
        %371 = vmatprep.subr.mxu0 0.0
        %372 = vmatpush1.msra.mxu0 0.0
        %373 = vmatprep.subr.mxu0 0.0
        %374 = vmatpush1.msra.mxu0 0.0
        %375 = vmatprep.subr.mxu0 0.0
        %376 = vmatpush1.msra.mxu0 0.0
        %377 = vmatprep.subr.mxu0 0.0
        %378 = vmatpush1.msra.mxu0 0.0
        %379 = vmatprep.subr.mxu0 0.0
        %380 = vmatpush1.msra.mxu0 0.0
        %381 = vmatprep.subr.mxu0 0.0
        %382 = vmatpush1.msra.mxu0 0.0
        %383 = vmatprep.subr.mxu0 0.0
        %384 = vmatpush1.msra.mxu0 0.0
        %385 = vmatprep.subr.mxu0 0.0
        %386 = vmatpush1.msra.mxu0 0.0
        %387 = vmatprep.subr.mxu0 0.0
        %388 = vmatpush1.msra.mxu0 0.0
        %389 = vmatprep.subr.mxu0 0.0
        %390 = vmatpush1.msra.mxu0 0.0
        %391 = vmatprep.subr.mxu0 0.0
        %392 = vmatpush1.msra.mxu0 0.0
        %393 = vmatprep.subr.mxu0 0.0
        %394 = vmatpush1.msra.mxu0 0.0
        %395 = vmatprep.subr.mxu0 0.0
        %396 = vmatpush1.msra.mxu0 0.0
        %397 = vmatprep.subr.mxu0 0.0
        %398 = vmatpush1.msra.mxu0 0.0
        %399 = vmatprep.subr.mxu0 0.0
        %400 = vmatpush1.msra.mxu0 0.0
        %401 = vmatprep.subr.mxu0 0.0
        %402 = vmatpush1.msra.mxu0 0.0
        %403 = vmatprep.subr.mxu0 0.0
        %404 = vmatpush1.msra.mxu0 0.0
        %405 = vmatprep.subr.mxu0 0.0
        %406 = vmatpush1.msra.mxu0 0.0
        %407 = vmatprep.subr.mxu0 0.0
        %408 = vmatpush1.msra.mxu0 0.0
        %409 = vmatprep.mubr.f32.mxu0 0.0
        %410 = vmatmul.mubr.f32.gmra.mrb[0].mxu0 %v294
        %v411 = vpop.f32.mrb[0].mxu0
        %v412 = vadd.f32 0.0, %v411
        %v413 = vpop.f32.mrb[0].mxu0
        %414 = vmatprep.mubr.f32.mxu0 0.0
        %415 = vmatmul.mubr.f32.gmra.mrb[0].mxu0 %v297
        %v416 = vpop.f32.mrb[0].mxu0
        %v417 = vadd.f32 0.0, %v416
        %v418 = vpop.f32.mrb[0].mxu0
        %419 = vmatprep.mubr.f32.mxu0 0.0
        %420 = vmatmul.mubr.f32.gmra.mrb[0].mxu0 %v300
        %v421 = vpop.f32.mrb[0].mxu0
        %v422 = vadd.f32 0.0, %v421
        %v423 = vpop.f32.mrb[0].mxu0
        %424 = vmatprep.mubr.f32.mxu0 0.0
        %425 = vmatmul.mubr.f32.gmra.mrb[0].mxu0 %v303
        %v426 = vpop.f32.mrb[0].mxu0
        %v427 = vadd.f32 0.0, %v426
        %v428 = vpop.f32.mrb[0].mxu0
        %429 = vmatprep.mubr.f32.mxu0 0.0
        %430 = vmatmul.mubr.f32.gmra.mrb[0].mxu0 %v306
        %v431 = vpop.f32.mrb[0].mxu0
        %v432 = vadd.f32 0.0, %v431
        %v433 = vpop.f32.mrb[0].mxu0
        %434 = vmatprep.mubr.f32.mxu0 0.0
        %435 = vmatmul.mubr.f32.gmra.mrb[0].mxu0 %v309
        %v436 = vpop.f32.mrb[0].mxu0
        %v437 = vadd.f32 0.0, %v436
        %v438 = vpop.f32.mrb[0].mxu0
        %439 = vmatprep.mubr.f32.mxu0 0.0
        %440 = vmatmul.mubr.f32.gmra.mrb[0].mxu0 %v312
        %v441 = vpop.f32.mrb[0].mxu0
        %v442 = vadd.f32 0.0, %v441
        %v443 = vpop.f32.mrb[0].mxu0
        %444 = vmatprep.mubr.f32.mxu0 0.0
        %445 = vmatmul.mubr.f32.gmra.mrb[0].mxu0 %v315
        %v446 = vpop.f32.mrb[0].mxu0
        %v447 = vadd.f32 0.0, %v446
        %v448 = vpop.f32.mrb[0].mxu0
        %449 = vmatprep.mubr.f32.mxu0 0.0
        %450 = vmatmul.mubr.f32.gmra.mrb[0].mxu0 %v318
        %v451 = vpop.f32.mrb[0].mxu0
        %v452 = vadd.f32 0.0, %v451
        %v453 = vpop.f32.mrb[0].mxu0
        %454 = vmatprep.mubr.f32.mxu0 0.0
        %455 = vmatmul.mubr.f32.gmra.mrb[0].mxu0 %v321
        %v456 = vpop.f32.mrb[0].mxu0
        %v457 = vadd.f32 0.0, %v456
        %v458 = vpop.f32.mrb[0].mxu0
        %459 = vmatprep.mubr.f32.mxu0 0.0
        %460 = vmatmul.mubr.f32.gmra.mrb[0].mxu0 %v324
        %v461 = vpop.f32.mrb[0].mxu0
        %v462 = vadd.f32 0.0, %v461
        %v463 = vpop.f32.mrb[0].mxu0
        %464 = vmatprep.mubr.f32.mxu0 0.0
        %465 = vmatmul.mubr.f32.gmra.mrb[0].mxu0 %v327
        %v466 = vpop.f32.mrb[0].mxu0
        %v467 = vadd.f32 0.0, %v466
        %v468 = vpop.f32.mrb[0].mxu0
        %469 = vmatprep.mubr.f32.mxu0 0.0
        %470 = vmatmul.mubr.f32.gmra.mrb[0].mxu0 %v330
        %v471 = vpop.f32.mrb[0].mxu0
        %v472 = vadd.f32 0.0, %v471
        %v473 = vpop.f32.mrb[0].mxu0
        %474 = vmatprep.mubr.f32.mxu0 0.0
        %475 = vmatmul.mubr.f32.gmra.mrb[0].mxu0 %v333
        %v476 = vpop.f32.mrb[0].mxu0
        %v477 = vadd.f32 0.0, %v476
        %v478 = vpop.f32.mrb[0].mxu0
        %479 = vmatprep.mubr.f32.mxu0 0.0
        %480 = vmatmul.mubr.f32.gmra.mrb[0].mxu0 %v336
        %v481 = vpop.f32.mrb[0].mxu0
        %v482 = vadd.f32 0.0, %v481
        %v483 = vpop.f32.mrb[0].mxu0
        %484 = vmatprep.mubr.f32.mxu0 0.0
        %485 = vmatmul.mubr.f32.gmra.mrb[0].mxu0 %v339
        %v486 = vpop.f32.mrb[0].mxu0
        %v487 = vadd.f32 0.0, %v486
        %v488 = vpop.f32.mrb[0].mxu0
        %489 = vdwg.mxu0
        %v491 = vlaneseq
        %v492 = vshrl.u32 %v491, 7
        %v493 = vsub.s32 0, %v492
        %v494 = vrot.slane %v259, %v493
        %v496 = vsub.f32 %v494, %v412
        %v497 = vsub.f32 %v494, %v417
        %v498 = vsub.f32 %v494, %v422
        %v499 = vsub.f32 %v494, %v427
        %v500 = vsub.f32 %v494, %v432
        %v501 = vsub.f32 %v494, %v437
        %v502 = vsub.f32 %v494, %v442
        %v503 = vsub.f32 %v494, %v447
        %v504 = vsub.f32 %v494, %v452
        %v505 = vsub.f32 %v494, %v457
        %v506 = vsub.f32 %v494, %v462
        %v507 = vsub.f32 %v494, %v467
        %v508 = vsub.f32 %v494, %v472
        %v509 = vsub.f32 %v494, %v477
        %v510 = vsub.f32 %v494, %v482
        %v511 = vsub.f32 %v494, %v487
        %vm512 = vcmask 261120
        %v513 = vsel %vm512, %v496, inf
        %514 = vmin.xlane.f32.xlu0 %v513
        %v515 = vpop.xlane.xlu0 %514
        %v516 = vsel %vm512, %v497, inf
        %517 = vmin.xlane.f32.xlu0 %v516
        %v518 = vpop.xlane.xlu0 %517
        %v519 = vsel %vm512, %v498, inf
        %520 = vmin.xlane.f32.xlu0 %v519
        %v521 = vpop.xlane.xlu0 %520
        %v522 = vsel %vm512, %v499, inf
        %523 = vmin.xlane.f32.xlu0 %v522
        %v524 = vpop.xlane.xlu0 %523
        %v525 = vsel %vm512, %v500, inf
        %526 = vmin.xlane.f32.xlu0 %v525
        %v527 = vpop.xlane.xlu0 %526
        %v528 = vsel %vm512, %v501, inf
        %529 = vmin.xlane.f32.xlu0 %v528
        %v530 = vpop.xlane.xlu0 %529
        %v531 = vsel %vm512, %v502, inf
        %532 = vmin.xlane.f32.xlu0 %v531
        %v533 = vpop.xlane.xlu0 %532
        %v534 = vsel %vm512, %v503, inf
        %535 = vmin.xlane.f32.xlu0 %v534
        %v536 = vpop.xlane.xlu0 %535
        %v537 = vsel %vm512, %v504, inf
        %538 = vmin.xlane.f32.xlu0 %v537
        %v539 = vpop.xlane.xlu0 %538
        %v540 = vsel %vm512, %v505, inf
        %541 = vmin.xlane.f32.xlu0 %v540
        %v542 = vpop.xlane.xlu0 %541
        %v543 = vsel %vm512, %v506, inf
        %544 = vmin.xlane.f32.xlu0 %v543
        %v545 = vpop.xlane.xlu0 %544
        %v546 = vsel %vm512, %v507, inf
        %547 = vmin.xlane.f32.xlu0 %v546
        %v548 = vpop.xlane.xlu0 %547
        %v549 = vsel %vm512, %v508, inf
        %550 = vmin.xlane.f32.xlu0 %v549
        %v551 = vpop.xlane.xlu0 %550
        %v552 = vsel %vm512, %v509, inf
        %553 = vmin.xlane.f32.xlu0 %v552
        %v554 = vpop.xlane.xlu0 %553
        %v555 = vsel %vm512, %v510, inf
        %556 = vmin.xlane.f32.xlu0 %v555
        %v557 = vpop.xlane.xlu0 %556
        %v558 = vsel %vm512, %v511, inf
        %559 = vmin.xlane.f32.xlu0 %v558
        %v560 = vpop.xlane.xlu0 %559
        %v561 = vlaneseq
        %v562 = vand.u32 %v561, 127
        %vm563 = vcmp.eq.f32.partialorder %v496, %v515
        %vm564 = vcmp.eq.f32.partialorder %v497, %v518
        %vm565 = vcmp.eq.f32.partialorder %v498, %v521
        %vm566 = vcmp.eq.f32.partialorder %v499, %v524
        %vm567 = vcmp.eq.f32.partialorder %v500, %v527
        %vm568 = vcmp.eq.f32.partialorder %v501, %v530
        %vm569 = vcmp.eq.f32.partialorder %v502, %v533
        %vm570 = vcmp.eq.f32.partialorder %v503, %v536
        %vm571 = vcmp.eq.f32.partialorder %v504, %v539
        %vm572 = vcmp.eq.f32.partialorder %v505, %v542
        %vm573 = vcmp.eq.f32.partialorder %v506, %v545
        %vm574 = vcmp.eq.f32.partialorder %v507, %v548
        %vm575 = vcmp.eq.f32.partialorder %v508, %v551
        %vm576 = vcmp.eq.f32.partialorder %v509, %v554
        %vm577 = vcmp.eq.f32.partialorder %v510, %v557
        %vm578 = vcmp.eq.f32.partialorder %v511, %v560
        %v579 = vsel %vm563, %v562, 32
        %v580 = vsel %vm564, %v562, 32
        %v581 = vsel %vm565, %v562, 32
        %v582 = vsel %vm566, %v562, 32
        %v583 = vsel %vm567, %v562, 32
        %v584 = vsel %vm568, %v562, 32
        %v585 = vsel %vm569, %v562, 32
        %v586 = vsel %vm570, %v562, 32
        %v587 = vsel %vm571, %v562, 32
        %v588 = vsel %vm572, %v562, 32
        %v589 = vsel %vm573, %v562, 32
        %v590 = vsel %vm574, %v562, 32
        %v591 = vsel %vm575, %v562, 32
        %v592 = vsel %vm576, %v562, 32
        %v593 = vsel %vm577, %v562, 32
        %v594 = vsel %vm578, %v562, 32
        %v595 = vsel %vm512, %v579, 2147483647
        %v596 = vand.u32 %v595, 65535
        %v597 = vshra.s32 %v595, 16
        %v598 = vcvt.s32.f32 %v596
        %v599 = vcvt.s32.f32 %v597
        %600 = vmin.xlane.f32.xlu0 %v599
        %v601 = vpop.xlane.xlu0 %600
        %vm602 = vcmp.eq.f32.partialorder %v599, %v601
        %v603 = vsel %vm602, %v598, inf
        %604 = vmin.xlane.f32.xlu0 %v603
        %v605 = vpop.xlane.xlu0 %604
        %v606 = vcvt.f32.s32 %v605
        %v607 = vcvt.f32.s32 %v601
        %v608 = vshll.u32 %v607, 16
        %v609 = vadd.s32 %v608, %v606
        %v610 = vsel %vm512, %v580, 2147483647
        %v611 = vand.u32 %v610, 65535
        %v612 = vshra.s32 %v610, 16
        %v613 = vcvt.s32.f32 %v611
        %v614 = vcvt.s32.f32 %v612
        %615 = vmin.xlane.f32.xlu0 %v614
        %v616 = vpop.xlane.xlu0 %615
        %vm617 = vcmp.eq.f32.partialorder %v614, %v616
        %v618 = vsel %vm617, %v613, inf
        %619 = vmin.xlane.f32.xlu0 %v618
        %v620 = vpop.xlane.xlu0 %619
        %v621 = vcvt.f32.s32 %v620
        %v622 = vcvt.f32.s32 %v616
        %v623 = vshll.u32 %v622, 16
        %v624 = vadd.s32 %v623, %v621
        %v625 = vsel %vm512, %v581, 2147483647
        %v626 = vand.u32 %v625, 65535
        %v627 = vshra.s32 %v625, 16
        %v628 = vcvt.s32.f32 %v626
        %v629 = vcvt.s32.f32 %v627
        %630 = vmin.xlane.f32.xlu0 %v629
        %v631 = vpop.xlane.xlu0 %630
        %vm632 = vcmp.eq.f32.partialorder %v629, %v631
        %v633 = vsel %vm632, %v628, inf
        %634 = vmin.xlane.f32.xlu0 %v633
        %v635 = vpop.xlane.xlu0 %634
        %v636 = vcvt.f32.s32 %v635
        %v637 = vcvt.f32.s32 %v631
        %v638 = vshll.u32 %v637, 16
        %v639 = vadd.s32 %v638, %v636
        %v640 = vsel %vm512, %v582, 2147483647
        %v641 = vand.u32 %v640, 65535
        %v642 = vshra.s32 %v640, 16
        %v643 = vcvt.s32.f32 %v641
        %v644 = vcvt.s32.f32 %v642
        %645 = vmin.xlane.f32.xlu0 %v644
        %v646 = vpop.xlane.xlu0 %645
        %vm647 = vcmp.eq.f32.partialorder %v644, %v646
        %v648 = vsel %vm647, %v643, inf
        %649 = vmin.xlane.f32.xlu0 %v648
        %v650 = vpop.xlane.xlu0 %649
        %v651 = vcvt.f32.s32 %v650
        %v652 = vcvt.f32.s32 %v646
        %v653 = vshll.u32 %v652, 16
        %v654 = vadd.s32 %v653, %v651
        %v655 = vsel %vm512, %v583, 2147483647
        %v656 = vand.u32 %v655, 65535
        %v657 = vshra.s32 %v655, 16
        %v658 = vcvt.s32.f32 %v656
        %v659 = vcvt.s32.f32 %v657
        %660 = vmin.xlane.f32.xlu0 %v659
        %v661 = vpop.xlane.xlu0 %660
        %vm662 = vcmp.eq.f32.partialorder %v659, %v661
        %v663 = vsel %vm662, %v658, inf
        %664 = vmin.xlane.f32.xlu0 %v663
        %v665 = vpop.xlane.xlu0 %664
        %v666 = vcvt.f32.s32 %v665
        %v667 = vcvt.f32.s32 %v661
        %v668 = vshll.u32 %v667, 16
        %v669 = vadd.s32 %v668, %v666
        %v670 = vsel %vm512, %v584, 2147483647
        %v671 = vand.u32 %v670, 65535
        %v672 = vshra.s32 %v670, 16
        %v673 = vcvt.s32.f32 %v671
        %v674 = vcvt.s32.f32 %v672
        %675 = vmin.xlane.f32.xlu0 %v674
        %v676 = vpop.xlane.xlu0 %675
        %vm677 = vcmp.eq.f32.partialorder %v674, %v676
        %v678 = vsel %vm677, %v673, inf
        %679 = vmin.xlane.f32.xlu0 %v678
        %v680 = vpop.xlane.xlu0 %679
        %v681 = vcvt.f32.s32 %v680
        %v682 = vcvt.f32.s32 %v676
        %v683 = vshll.u32 %v682, 16
        %v684 = vadd.s32 %v683, %v681
        %v685 = vsel %vm512, %v585, 2147483647
        %v686 = vand.u32 %v685, 65535
        %v687 = vshra.s32 %v685, 16
        %v688 = vcvt.s32.f32 %v686
        %v689 = vcvt.s32.f32 %v687
        %690 = vmin.xlane.f32.xlu0 %v689
        %v691 = vpop.xlane.xlu0 %690
        %vm692 = vcmp.eq.f32.partialorder %v689, %v691
        %v693 = vsel %vm692, %v688, inf
        %694 = vmin.xlane.f32.xlu0 %v693
        %v695 = vpop.xlane.xlu0 %694
        %v696 = vcvt.f32.s32 %v695
        %v697 = vcvt.f32.s32 %v691
        %v698 = vshll.u32 %v697, 16
        %v699 = vadd.s32 %v698, %v696
        %v700 = vsel %vm512, %v586, 2147483647
        %v701 = vand.u32 %v700, 65535
        %v702 = vshra.s32 %v700, 16
        %v703 = vcvt.s32.f32 %v701
        %v704 = vcvt.s32.f32 %v702
        %705 = vmin.xlane.f32.xlu0 %v704
        %v706 = vpop.xlane.xlu0 %705
        %vm707 = vcmp.eq.f32.partialorder %v704, %v706
        %v708 = vsel %vm707, %v703, inf
        %709 = vmin.xlane.f32.xlu0 %v708
        %v710 = vpop.xlane.xlu0 %709
        %v711 = vcvt.f32.s32 %v710
        %v712 = vcvt.f32.s32 %v706
        %v713 = vshll.u32 %v712, 16
        %v714 = vadd.s32 %v713, %v711
        %v715 = vsel %vm512, %v587, 2147483647
        %v716 = vand.u32 %v715, 65535
        %v717 = vshra.s32 %v715, 16
        %v718 = vcvt.s32.f32 %v716
        %v719 = vcvt.s32.f32 %v717
        %720 = vmin.xlane.f32.xlu0 %v719
        %v721 = vpop.xlane.xlu0 %720
        %vm722 = vcmp.eq.f32.partialorder %v719, %v721
        %v723 = vsel %vm722, %v718, inf
        %724 = vmin.xlane.f32.xlu0 %v723
        %v725 = vpop.xlane.xlu0 %724
        %v726 = vcvt.f32.s32 %v725
        %v727 = vcvt.f32.s32 %v721
        %v728 = vshll.u32 %v727, 16
        %v729 = vadd.s32 %v728, %v726
        %v730 = vsel %vm512, %v588, 2147483647
        %v731 = vand.u32 %v730, 65535
        %v732 = vshra.s32 %v730, 16
        %v733 = vcvt.s32.f32 %v731
        %v734 = vcvt.s32.f32 %v732
        %735 = vmin.xlane.f32.xlu0 %v734
        %v736 = vpop.xlane.xlu0 %735
        %vm737 = vcmp.eq.f32.partialorder %v734, %v736
        %v738 = vsel %vm737, %v733, inf
        %739 = vmin.xlane.f32.xlu0 %v738
        %v740 = vpop.xlane.xlu0 %739
        %v741 = vcvt.f32.s32 %v740
        %v742 = vcvt.f32.s32 %v736
        %v743 = vshll.u32 %v742, 16
        %v744 = vadd.s32 %v743, %v741
        %v745 = vsel %vm512, %v589, 2147483647
        %v746 = vand.u32 %v745, 65535
        %v747 = vshra.s32 %v745, 16
        %v748 = vcvt.s32.f32 %v746
        %v749 = vcvt.s32.f32 %v747
        %750 = vmin.xlane.f32.xlu0 %v749
        %v751 = vpop.xlane.xlu0 %750
        %vm752 = vcmp.eq.f32.partialorder %v749, %v751
        %v753 = vsel %vm752, %v748, inf
        %754 = vmin.xlane.f32.xlu0 %v753
        %v755 = vpop.xlane.xlu0 %754
        %v756 = vcvt.f32.s32 %v755
        %v757 = vcvt.f32.s32 %v751
        %v758 = vshll.u32 %v757, 16
        %v759 = vadd.s32 %v758, %v756
        %v760 = vsel %vm512, %v590, 2147483647
        %v761 = vand.u32 %v760, 65535
        %v762 = vshra.s32 %v760, 16
        %v763 = vcvt.s32.f32 %v761
        %v764 = vcvt.s32.f32 %v762
        %765 = vmin.xlane.f32.xlu0 %v764
        %v766 = vpop.xlane.xlu0 %765
        %vm767 = vcmp.eq.f32.partialorder %v764, %v766
        %v768 = vsel %vm767, %v763, inf
        %769 = vmin.xlane.f32.xlu0 %v768
        %v770 = vpop.xlane.xlu0 %769
        %v771 = vcvt.f32.s32 %v770
        %v772 = vcvt.f32.s32 %v766
        %v773 = vshll.u32 %v772, 16
        %v774 = vadd.s32 %v773, %v771
        %v775 = vsel %vm512, %v591, 2147483647
        %v776 = vand.u32 %v775, 65535
        %v777 = vshra.s32 %v775, 16
        %v778 = vcvt.s32.f32 %v776
        %v779 = vcvt.s32.f32 %v777
        %780 = vmin.xlane.f32.xlu0 %v779
        %v781 = vpop.xlane.xlu0 %780
        %vm782 = vcmp.eq.f32.partialorder %v779, %v781
        %v783 = vsel %vm782, %v778, inf
        %784 = vmin.xlane.f32.xlu0 %v783
        %v785 = vpop.xlane.xlu0 %784
        %v786 = vcvt.f32.s32 %v785
        %v787 = vcvt.f32.s32 %v781
        %v788 = vshll.u32 %v787, 16
        %v789 = vadd.s32 %v788, %v786
        %v790 = vsel %vm512, %v592, 2147483647
        %v791 = vand.u32 %v790, 65535
        %v792 = vshra.s32 %v790, 16
        %v793 = vcvt.s32.f32 %v791
        %v794 = vcvt.s32.f32 %v792
        %795 = vmin.xlane.f32.xlu0 %v794
        %v796 = vpop.xlane.xlu0 %795
        %vm797 = vcmp.eq.f32.partialorder %v794, %v796
        %v798 = vsel %vm797, %v793, inf
        %799 = vmin.xlane.f32.xlu0 %v798
        %v800 = vpop.xlane.xlu0 %799
        %v801 = vcvt.f32.s32 %v800
        %v802 = vcvt.f32.s32 %v796
        %v803 = vshll.u32 %v802, 16
        %v804 = vadd.s32 %v803, %v801
        %v805 = vsel %vm512, %v593, 2147483647
        %v806 = vand.u32 %v805, 65535
        %v807 = vshra.s32 %v805, 16
        %v808 = vcvt.s32.f32 %v806
        %v809 = vcvt.s32.f32 %v807
        %810 = vmin.xlane.f32.xlu0 %v809
        %v811 = vpop.xlane.xlu0 %810
        %vm812 = vcmp.eq.f32.partialorder %v809, %v811
        %v813 = vsel %vm812, %v808, inf
        %814 = vmin.xlane.f32.xlu0 %v813
        %v815 = vpop.xlane.xlu0 %814
        %v816 = vcvt.f32.s32 %v815
        %v817 = vcvt.f32.s32 %v811
        %v818 = vshll.u32 %v817, 16
        %v819 = vadd.s32 %v818, %v816
        %v820 = vsel %vm512, %v594, 2147483647
        %v821 = vand.u32 %v820, 65535
        %v822 = vshra.s32 %v820, 16
        %v823 = vcvt.s32.f32 %v821
        %v824 = vcvt.s32.f32 %v822
        %825 = vmin.xlane.f32.xlu0 %v824
        %v826 = vpop.xlane.xlu0 %825
        %vm827 = vcmp.eq.f32.partialorder %v824, %v826
        %v828 = vsel %vm827, %v823, inf
        %829 = vmin.xlane.f32.xlu0 %v828
        %v830 = vpop.xlane.xlu0 %829
        %v831 = vcvt.f32.s32 %v830
        %v832 = vcvt.f32.s32 %v826
        %v833 = vshll.u32 %v832, 16
        %v834 = vadd.s32 %v833, %v831
        %vm835 = vcmp.eq.s32.totalorder %v562, %v609
        %vm836 = vcmp.eq.s32.totalorder %v562, %v624
        %vm837 = vcmp.eq.s32.totalorder %v562, %v639
        %vm838 = vcmp.eq.s32.totalorder %v562, %v654
        %vm839 = vcmp.eq.s32.totalorder %v562, %v669
        %vm840 = vcmp.eq.s32.totalorder %v562, %v684
        %vm841 = vcmp.eq.s32.totalorder %v562, %v699
        %vm842 = vcmp.eq.s32.totalorder %v562, %v714
        %vm843 = vcmp.eq.s32.totalorder %v562, %v729
        %vm844 = vcmp.eq.s32.totalorder %v562, %v744
        %vm845 = vcmp.eq.s32.totalorder %v562, %v759
        %vm846 = vcmp.eq.s32.totalorder %v562, %v774
        %vm847 = vcmp.eq.s32.totalorder %v562, %v789
        %vm848 = vcmp.eq.s32.totalorder %v562, %v804
        %vm849 = vcmp.eq.s32.totalorder %v562, %v819
        %vm850 = vcmp.eq.s32.totalorder %v562, %v834
        %v851 = vsel %vm835, 1, 0
        %v852 = vsel %vm836, 1, 0
        %v853 = vsel %vm837, 1, 0
        %v854 = vsel %vm838, 1, 0
        %v855 = vsel %vm839, 1, 0
        %v856 = vsel %vm840, 1, 0
        %v857 = vsel %vm841, 1, 0
        %v858 = vsel %vm842, 1, 0
        %v859 = vsel %vm843, 1, 0
        %v860 = vsel %vm844, 1, 0
        %v861 = vsel %vm845, 1, 0
        %v862 = vsel %vm846, 1, 0
        %v863 = vsel %vm847, 1, 0
        %v864 = vsel %vm848, 1, 0
        %v865 = vsel %vm849, 1, 0
        %v866 = vsel %vm850, 1, 0
        %v867 = vcvt.s32.f32 %v851
        %v868 = vcvt.s32.f32 %v852
        %v869 = vcvt.s32.f32 %v853
        %v870 = vcvt.s32.f32 %v854
        %v871 = vcvt.s32.f32 %v855
        %v872 = vcvt.s32.f32 %v856
        %v873 = vcvt.s32.f32 %v857
        %v874 = vcvt.s32.f32 %v858
        %v875 = vcvt.s32.f32 %v859
        %v876 = vcvt.s32.f32 %v860
        %v877 = vcvt.s32.f32 %v861
        %v878 = vcvt.s32.f32 %v862
        %v879 = vcvt.s32.f32 %v863
        %v880 = vcvt.s32.f32 %v864
        %v881 = vcvt.s32.f32 %v865
        %v882 = vcvt.s32.f32 %v866
        %v883 = vsel %vm512, %v258, 0
        %v886 = vsel %vm512, %v867, 0
        %v889 = vsel %vm512, %v868, 0
        %v892 = vsel %vm512, %v869, 0
        %v895 = vsel %vm512, %v870, 0
        %v898 = vsel %vm512, %v871, 0
        %v901 = vsel %vm512, %v872, 0
        %v904 = vsel %vm512, %v873, 0
        %v907 = vsel %vm512, %v874, 0
        %v910 = vsel %vm512, %v875, 0
        %v913 = vsel %vm512, %v876, 0
        %v916 = vsel %vm512, %v877, 0
        %v919 = vsel %vm512, %v878, 0
        %v922 = vsel %vm512, %v879, 0
        %v925 = vsel %vm512, %v880, 0
        %v928 = vsel %vm512, %v881, 0
        %v931 = vsel %vm512, %v882, 0
        %933 = vmatprep.subr.mxu0 0.0
        %934 = vmatpush1.xpose.msra.mxu0 %v886
        %935 = vmatprep.subr.mxu0 0.0
        %936 = vmatpush1.xpose.msra.mxu0 %v889
        %937 = vmatprep.subr.mxu0 0.0
        %938 = vmatpush1.xpose.msra.mxu0 %v892
        %939 = vmatprep.subr.mxu0 0.0
        %940 = vmatpush1.xpose.msra.mxu0 %v895
        %941 = vmatprep.subr.mxu0 0.0
        %942 = vmatpush1.xpose.msra.mxu0 %v898
        %943 = vmatprep.subr.mxu0 0.0
        %944 = vmatpush1.xpose.msra.mxu0 %v901
        %945 = vmatprep.subr.mxu0 0.0
        %946 = vmatpush1.xpose.msra.mxu0 %v904
        %947 = vmatprep.subr.mxu0 0.0
        %948 = vmatpush1.xpose.msra.mxu0 %v907
        %949 = vmatprep.subr.mxu0 0.0
        %950 = vmatpush1.xpose.msra.mxu0 %v910
        %951 = vmatprep.subr.mxu0 0.0
        %952 = vmatpush1.xpose.msra.mxu0 %v913
        %953 = vmatprep.subr.mxu0 0.0
        %954 = vmatpush1.xpose.msra.mxu0 %v916
        %955 = vmatprep.subr.mxu0 0.0
        %956 = vmatpush1.xpose.msra.mxu0 %v919
        %957 = vmatprep.subr.mxu0 0.0
        %958 = vmatpush1.xpose.msra.mxu0 %v922
        %959 = vmatprep.subr.mxu0 0.0
        %960 = vmatpush1.xpose.msra.mxu0 %v925
        %961 = vmatprep.subr.mxu0 0.0
        %962 = vmatpush1.xpose.msra.mxu0 %v928
        %963 = vmatprep.subr.mxu0 0.0
        %964 = vmatpush1.xpose.msra.mxu0 %v931
        %965 = vmatprep.subr.mxu0 0.0
        %966 = vmatpush1.xpose.msra.mxu0 0.0
        %967 = vmatprep.subr.mxu0 0.0
        %968 = vmatpush1.xpose.msra.mxu0 0.0
        %969 = vmatprep.subr.mxu0 0.0
        %970 = vmatpush1.xpose.msra.mxu0 0.0
        %971 = vmatprep.subr.mxu0 0.0
        %972 = vmatpush1.xpose.msra.mxu0 0.0
        %973 = vmatprep.subr.mxu0 0.0
        %974 = vmatpush1.xpose.msra.mxu0 0.0
        %975 = vmatprep.subr.mxu0 0.0
        %976 = vmatpush1.xpose.msra.mxu0 0.0
        %977 = vmatprep.subr.mxu0 0.0
        %978 = vmatpush1.xpose.msra.mxu0 0.0
        %979 = vmatprep.subr.mxu0 0.0
        %980 = vmatpush1.xpose.msra.mxu0 0.0
        %981 = vmatprep.subr.mxu0 0.0
        %982 = vmatpush1.xpose.msra.mxu0 0.0
        %983 = vmatprep.subr.mxu0 0.0
        %984 = vmatpush1.xpose.msra.mxu0 0.0
        %985 = vmatprep.subr.mxu0 0.0
        %986 = vmatpush1.xpose.msra.mxu0 0.0
        %987 = vmatprep.subr.mxu0 0.0
        %988 = vmatpush1.xpose.msra.mxu0 0.0
        %989 = vmatprep.subr.mxu0 0.0
        %990 = vmatpush1.xpose.msra.mxu0 0.0
        %991 = vmatprep.subr.mxu0 0.0
        %992 = vmatpush1.xpose.msra.mxu0 0.0
        %993 = vmatprep.subr.mxu0 0.0
        %994 = vmatpush1.xpose.msra.mxu0 0.0
        %995 = vmatprep.subr.mxu0 0.0
        %996 = vmatpush1.xpose.msra.mxu0 0.0
        %997 = vmatprep.mubr.f32.mxu0 0.0
        %998 = vmatmul.mubr.f32.gmra.mrb[0].mxu0 %v883
        %v999 = vpop.f32.mrb[0].mxu0
        %v1000 = vadd.f32 0.0, %v999
        %v1001 = vpop.f32.mrb[0].mxu0
        %1002 = vdwg.mxu0
        %1003 = vst [vmem:[%s249] sm:$0xf] %v1000
        %v1004 = vsel %vm512, %v867, 0.0
        %v1005 = vsel %vm512, %v868, 0.0
        %v1006 = vadd.f32 %v1004, %v1005
        %v1007 = vsel %vm512, %v869, 0.0
        %v1008 = vadd.f32 %v1006, %v1007
        %v1009 = vsel %vm512, %v870, 0.0
        %v1010 = vadd.f32 %v1008, %v1009
        %v1011 = vsel %vm512, %v871, 0.0
        %v1012 = vadd.f32 %v1010, %v1011
        %v1013 = vsel %vm512, %v872, 0.0
        %v1014 = vadd.f32 %v1012, %v1013
        %v1015 = vsel %vm512, %v873, 0.0
        %v1016 = vadd.f32 %v1014, %v1015
        %v1017 = vsel %vm512, %v874, 0.0
        %v1018 = vadd.f32 %v1016, %v1017
        %v1019 = vsel %vm512, %v875, 0.0
        %v1020 = vadd.f32 %v1018, %v1019
        %v1021 = vsel %vm512, %v876, 0.0
        %v1022 = vadd.f32 %v1020, %v1021
        %v1023 = vsel %vm512, %v877, 0.0
        %v1024 = vadd.f32 %v1022, %v1023
        %v1025 = vsel %vm512, %v878, 0.0
        %v1026 = vadd.f32 %v1024, %v1025
        %v1027 = vsel %vm512, %v879, 0.0
        %v1028 = vadd.f32 %v1026, %v1027
        %v1029 = vsel %vm512, %v880, 0.0
        %v1030 = vadd.f32 %v1028, %v1029
        %v1031 = vsel %vm512, %v881, 0.0
        %v1032 = vadd.f32 %v1030, %v1031
        %v1033 = vsel %vm512, %v882, 0.0
        %v1034 = vadd.f32 %v1032, %v1033
        %v1035 = vrot.slane %v1034, 4
        %v1036 = vadd.f32 %v1034, %v1035
        %v1037 = vrot.slane %v1036, 2
        %v1038 = vadd.f32 %v1036, %v1037
        %v1039 = vrot.slane %v1038, 1
        %v1040 = vadd.f32 %v1038, %v1039
        %v1041 = vmul.f32 %v257, %v257
        %v1042 = vsel %vm341, %v1041, 0.0
        %v1043 = vrot.slane %v1042, 4
        %v1044 = vadd.f32 %v1042, %v1043
        %v1045 = vrot.slane %v1044, 2
        %v1046 = vadd.f32 %v1044, %v1045
        %v1047 = vrot.slane %v1046, 1
        %v1048 = vadd.f32 %v1046, %v1047
        %1049 = vadd.xlane.f32.xlu0 %v1048
        %v1050 = vpop.xlane.xlu0 %1049
        %v1051 = vadd.f32 %v515, %v518
        %v1052 = vadd.f32 %v1051, %v521
        %v1053 = vadd.f32 %v1052, %v524
        %v1054 = vadd.f32 %v1053, %v527
        %v1055 = vadd.f32 %v1054, %v530
        %v1056 = vadd.f32 %v1055, %v533
        %v1057 = vadd.f32 %v1056, %v536
        %v1058 = vadd.f32 %v1057, %v539
        %v1059 = vadd.f32 %v1058, %v542
        %v1060 = vadd.f32 %v1059, %v545
        %v1061 = vadd.f32 %v1060, %v548
        %v1062 = vadd.f32 %v1061, %v551
        %v1063 = vadd.f32 %v1062, %v554
        %v1064 = vadd.f32 %v1063, %v557
        %v1065 = vadd.f32 %v1064, %v560
        %v1066 = vrot.slane %v1065, 4
        %v1067 = vadd.f32 %v1065, %v1066
        %v1068 = vrot.slane %v1067, 2
        %v1069 = vadd.f32 %v1067, %v1068
        %v1070 = vrot.slane %v1069, 1
        %v1071 = vadd.f32 %v1069, %v1070
        %v1072 = vmul.f32 %v1071, 2.0
        %v1073 = vadd.f32 %v1050, %v1072
        %v1074 = vlaneseq
        %v1075 = vshrl.u32 %v1074, 7
        %vm1076 = vcmp.eq.s32.totalorder %v1075, 0
        %v1077 = vsel %vm1076, %v1040, %v1073
        %vm1078 = vcmask 254976
        %1079 = vst.msk [vmem:[%s256] sm:$0x3] %vm1078, %v1077
        %s1080 = sand.u32 %s118, 1
        %s1081 = scalar_lea.sflag [#allocation4], %s1080
        %s1082 = sand.u32 %s118, 1
        %s1083 = smul.addr %s1082, 4
        %s1084 = scalar_lea.vmem [#allocation7], %s1083
        %s1085 = sand.u32 %s146, 1
        %s1086 = scalar_lea.sflag [#allocation9], %s1085
        %s1087 = sand.u32 %s146, 1
        %s1088 = smul.addr %s1087, 2
        %s1089 = scalar_lea.vmem [#allocation8], %s1088
        // Predicated region
        $region41: #{tpu_custom_call.1} parent=31 // pred_check
          %p1090 = pneg %p128
        $region42: #{tpu_custom_call.1} parent=31 // pred_check_branch
          %1092 = sbr.rel (%p1090) target = $region44
        $region43: #{tpu_custom_call.1} parent=31 // pred_region
          %s1094 = ssub.s32 64, 64
          %1095 = vsyncadd %s1081, %s1094
          %s1096 = smul.addr %s30, 2
          %s1097 = sadd.s32 %s31, %s1096
          %s1098 = smul.addr %s1097, 64
          %s1099 = scalar_lea.hbm %s3, %s1098
          %s1101 = sshll.u32 %s1084, 4
          %s1102 = int_to_ptr.vmem [resolvable:$true] %s1101
          %1104 = dma.vmem_to_hbm [thread:$0]  %s1102, 64, %s1099, %s1081
        $region44: #{tpu_custom_call.1} parent=31 // pred_fallthru
          _
        // Predicated region
        $region45: #{tpu_custom_call.1} parent=31 // pred_check
          %p1105 = pneg %p156
        $region46: #{tpu_custom_call.1} parent=31 // pred_check_branch
          %1107 = sbr.rel (%p1105) target = $region48
        $region47: #{tpu_custom_call.1} parent=31 // pred_region
          %s1109 = ssub.s32 32, 32
          %1110 = vsyncadd %s1086, %s1109
          %s1111 = smul.addr %s30, 2
          %s1112 = sadd.s32 %s31, %s1111
          %s1113 = smul.addr %s1112, 32
          %s1114 = scalar_lea.hbm %s4, %s1113
          %s1116 = sshll.u32 %s1089, 4
          %s1117 = int_to_ptr.vmem [resolvable:$true] %s1116
          %1119 = dma.vmem_to_hbm [thread:$0]  %s1117, 32, %s1114, %s1086
        $region48: #{tpu_custom_call.1} parent=31 // pred_fallthru
          _
      $region32: #{tpu_custom_call.1} parent=5 // pred_fallthru
        _
      %p1120 = scmp.le.s32.totalorder 2, %s21
      // Predicated region
      $region49: #{tpu_custom_call.1} parent=5 // pred_check
        %p1121 = pneg %p1120
      $region50: #{tpu_custom_call.1} parent=5 // pred_check_branch
        %1123 = sbr.rel (%p1121) target = $region52
      $region51: #{tpu_custom_call.1} parent=5 // pred_region
        %s1124 = ssub.s32 %s21, 2
        // Predicated region
        $region53: #{tpu_custom_call.1} parent=51 // pred_check
          %p1125 = pneg %p134
        $region54: #{tpu_custom_call.1} parent=51 // pred_check_branch
          %1127 = sbr.rel (%p1125) target = $region56
        $region55: #{tpu_custom_call.1} parent=51 // pred_region
          %s1128 = sand.u32 %s119, 1
          %s1129 = scalar_lea.sflag [#allocation4], %s1128
          %s1130 = sand.u32 %s119, 1
          %s1131 = smul.addr %s1130, 4
          %s1132 = scalar_lea.vmem [#allocation7], %s1131
          %1133 = dma.done %s1129, 64
        $region56: #{tpu_custom_call.1} parent=51 // pred_fallthru
          _
        // Predicated region
        $region57: #{tpu_custom_call.1} parent=51 // pred_check
          %p1134 = pneg %p162
        $region58: #{tpu_custom_call.1} parent=51 // pred_check_branch
          %1136 = sbr.rel (%p1134) target = $region60
        $region59: #{tpu_custom_call.1} parent=51 // pred_region
          %s1137 = sand.u32 %s147, 1
          %s1138 = scalar_lea.sflag [#allocation9], %s1137
          %s1139 = sand.u32 %s147, 1
          %s1140 = smul.addr %s1139, 2
          %s1141 = scalar_lea.vmem [#allocation8], %s1140
          %1142 = dma.done %s1138, 32
        $region60: #{tpu_custom_call.1} parent=51 // pred_fallthru
          _
      $region52: #{tpu_custom_call.1} parent=5 // pred_fallthru
        _
    $region6: #{tpu_custom_call.1} parent=1 // loop_footer
      %s25 = sadd.s32 1, %s21
    $region7: #{tpu_custom_call.1} parent=1 // loop_footer_branch
      %20 = sbr.rel target = $region3
    $region8: #{tpu_custom_call.1} parent=1 // loop_exit
      _
    %1143 = vsyncpa [#allocation3], 1
    %s1144 = scalar_lea.sflag [#allocation3], 1
    %1145 = vsyncpa %s1144, 1
    %1146 = vsyncpa [#allocation6], 1
    %1147 = vsyncpa [#allocation4], 1
    %s1148 = scalar_lea.sflag [#allocation4], 1
    %1149 = vsyncpa %s1148, 1
    %1150 = vsyncpa [#allocation9], 1
    %s1151 = scalar_lea.sflag [#allocation9], 1
    %1152 = vsyncpa %s1151, 1

</llo_original>
